<compile_context>
chip_gen: v6e
topology: v6e:2x2x1
jax: 0.10.0
libtpu: 0.0.40
codegen_flags: <defaults>
</compile_context>

<pallas_src>
import functools

import jax
import jax.numpy as jnp
from jax import lax
from jax.experimental import pallas as pl
from jax.experimental.pallas import tpu as pltpu

# Flat parameter-vector layout (SMEM resident).
_W1, _B1 = 0, 54      # w1 (6,9) -> [0,54),   b1 (6,) -> [54,60)
_W2, _B2 = 60, 78     # w2 (3,6) -> [60,78),  b2 (3,) -> [78,81)
_W3, _B3 = 81, 84     # w3 (1,3) -> [81,84),  b3 (1,) -> [84,85)
_NPARAM = 85

_LANE = 128           # lane width
_SUB = 16             # sublane rows per inner step (2 f32 vregs per value)


def _mlp_kernel(theta_ref, x_ref, o_ref, *, approx_recip):
    """theta_ref: (85,) f32 in SMEM; x_ref: (9, TB, 128); o_ref: (TB, 128) f32."""
    tb = x_ref.shape[1]
    f32 = jnp.float32

    def chunk(c, carry):
        s = pl.multiple_of(c * _SUB, _SUB)
        xs = [x_ref[k, pl.ds(s, _SUB), :].astype(f32) for k in range(9)]

        # Layer 1: Linear(9 -> 6) + ReLU  (scalar-weight broadcast MAC on the VPU)
        h1 = []
        for o in range(6):
            acc = theta_ref[_B1 + o] + theta_ref[_W1 + 9 * o] * xs[0]
            for k in range(1, 9):
                acc = acc + theta_ref[_W1 + 9 * o + k] * xs[k]
            h1.append(jnp.maximum(acc, 0.0))

        # Layer 2: Linear(6 -> 3) + ReLU
        h2 = []
        for o in range(3):
            acc = theta_ref[_B2 + o] + theta_ref[_W2 + 6 * o] * h1[0]
            for k in range(1, 6):
                acc = acc + theta_ref[_W2 + 6 * o + k] * h1[k]
            h2.append(jnp.maximum(acc, 0.0))

        # Layer 3: Linear(3 -> 1) + Sigmoid  (exp on EUP; optional approx recip)
        z = theta_ref[_B3] + theta_ref[_W3] * h2[0]
        for k in range(1, 3):
            z = z + theta_ref[_W3 + k] * h2[k]
        o_ref[pl.ds(s, _SUB), :] = pl.reciprocal(1.0 + jnp.exp(-z),
                                                 approx=approx_recip)
        return carry

    lax.fori_loop(0, tb // _SUB, chunk, 0)


def pack_params(p):
    """Pack torch-layout params into one flat f32 vector for SMEM."""
    theta = jnp.concatenate([
        p["w1"].reshape(-1), p["b1"].reshape(-1),
        p["w2"].reshape(-1), p["b2"].reshape(-1),
        p["w3"].reshape(-1), p["b3"].reshape(-1),
    ]).astype(jnp.float32)
    assert theta.shape == (_NPARAM,)
    return theta


def _forward_t(xt, theta, tile_b, approx_recip):
    """Core path. xt: (9, B) feature-major (f32 or bf16). Returns (B,) f32."""
    f, b = xt.shape
    assert f == 9, "expected feature-major input of shape (9, B)"
    assert tile_b >= _LANE * _SUB and tile_b % (_LANE * _SUB) == 0

    align = _LANE * _SUB                            # 2048
    b_pad = ((b + align - 1) // align) * align
    if b_pad != b:                                  # only ragged batches pay a pad copy
        xt = jnp.pad(xt, ((0, 0), (0, b_pad - b)))
    bsub = b_pad // _LANE                           # batch rows of 128 lanes
    tb = min(tile_b // _LANE, bsub)                 # sublane rows per grid step
    n_tiles = pl.cdiv(bsub, tb)

    x3 = xt.reshape(9, bsub, _LANE)                 # free bitcast (no data movement)

    out = pl.pallas_call(
        functools.partial(_mlp_kernel, approx_recip=approx_recip),
        out_shape=jax.ShapeDtypeStruct((bsub, _LANE), jnp.float32),
        grid=(n_tiles,),
        in_specs=[
            pl.BlockSpec(memory_space=pltpu.MemorySpace.SMEM),    # theta, resident
            pl.BlockSpec((9, tb, _LANE), lambda i: (0, i, 0)),    # streamed x tiles
        ],
        out_specs=pl.BlockSpec((tb, _LANE), lambda i: (i, 0)),    # lane-dense stores
        compiler_params=pltpu.CompilerParams(
            dimension_semantics=("parallel",),
        ),
    )(theta, x3)

    return out.reshape(b_pad)[:b]                   # (B,) f32


@functools.partial(jax.jit, static_argnames=("tile_b", "approx_recip"))
def mlp_forward_t(xt, params, tile_b=65536, approx_recip=True):
    """Fast path: xt is (9, B) feature-major; returns (B,). No relayout passes."""
    return _forward_t(xt, pack_params(params), tile_b, approx_recip)


@functools.partial(jax.jit, static_argnames=("tile_b", "approx_recip"))
def mlp_forward(x, params, tile_b=65536, approx_recip=True):
    """PyTorch-contract path: x is (B, 9); returns (B, 1).

    Pays one XLA transpose pass for the (B,9)->(9,B) relayout; producers that
    can emit feature-major data should call mlp_forward_t instead.
    """
    return _forward_t(x.T, pack_params(params), tile_b, approx_recip).reshape(-1, 1)


def init_params(key):
    """torch.nn.Linear-style init: U(-1/sqrt(fan_in), 1/sqrt(fan_in)).

    Weights use the PyTorch (out_features, in_features) layout; biases are (out,).
    """
    ks = jax.random.split(key, 6)

    def linear(kw, kb, fan_in, fan_out):
        bound = 1.0 / jnp.sqrt(jnp.float32(fan_in))
        w = jax.random.uniform(kw, (fan_out, fan_in), jnp.float32, -bound, bound)
        b = jax.random.uniform(kb, (fan_out,), jnp.float32, -bound, bound)
        return w, b

    w1, b1 = linear(ks[0], ks[1], 9, 6)
    w2, b2 = linear(ks[2], ks[3], 6, 3)
    w3, b3 = linear(ks[4], ks[5], 3, 1)
    return {"w1": w1, "b1": b1, "w2": w2, "b2": b2, "w3": w3, "b3": b3}


def reference_forward(x, p):
    h1 = jnp.maximum(x @ p["w1"].T + p["b1"], 0.0)
    h2 = jnp.maximum(h1 @ p["w2"].T + p["b2"], 0.0)
    return jax.nn.sigmoid(h2 @ p["w3"].T + p["b3"])


if __name__ == "__main__":
    key = jax.random.PRNGKey(0)
    k_x, k_p = jax.random.split(key)

    # Small ragged batch: exercises tail padding, the single-tile grid and both
    # entry points.
    B = 300
    x = jax.random.normal(k_x, (B, 9), jnp.float32)
    params = init_params(k_p)
    ref = reference_forward(x, params)

    # PyTorch-contract path, exact reciprocal, tight tolerance.
    out = mlp_forward(x, params, tile_b=2048, approx_recip=False)
    out = jax.block_until_ready(out)
    assert out.shape == (B, 1)
    assert jnp.allclose(out, ref, atol=1e-5, rtol=1e-5)

    # Feature-major fast path with the EUP approx-reciprocal sigmoid epilogue.
    out_t = mlp_forward_t(x.T, params, tile_b=2048)
    out_t = jax.block_until_ready(out_t)
    assert out_t.shape == (B,)
    assert jnp.allclose(out_t, ref[:, 0], atol=2e-2, rtol=2e-2)

    print("KERNEL_OK")
</pallas_src>

<mosaic_0001>
module attributes {stable_mosaic.version = 11 : i64} {
  func.func @_mlp_kernel(%arg0: i32, %arg1: memref<85xf32, #tpu.memory_space<smem>>, %arg2: memref<9x16x128xf32, #tpu.memory_space<vmem>>, %arg3: memref<16x128xf32, #tpu.memory_space<vmem>>) attributes {dimension_semantics = [#tpu.dimension_semantics<parallel>], iteration_bounds = array<i64: 1>, scalar_prefetch = 0 : i64, scratch_operands = 0 : i64, tpu.core_type = #tpu.core_type<tc>, window_params = [{transform_indices = @transform_0, window_bounds = array<i64: 85>}, {transform_indices = @transform_1, window_bounds = array<i64: 9, 16, 128>}, {transform_indices = @transform_2, window_bounds = array<i64: 16, 128>}]} {
    %c0_i32 = arith.constant 0 : i32
    %c16_i32 = arith.constant 16 : i32
    %0 = arith.muli %c0_i32, %c16_i32 : i32
    %1 = tpu.assume_multiple %0, 16 : i32
    %c0 = arith.constant 0 : index
    %2 = arith.index_cast %1 : i32 to index
    %c0_0 = arith.constant 0 : index
    %3 = vector.load %arg2[%c0, %2, %c0_0] : memref<9x16x128xf32, #tpu.memory_space<vmem>>, vector<1x16x128xf32>
    %4 = vector.shape_cast %3 : vector<1x16x128xf32> to vector<16x128xf32>
    %c1 = arith.constant 1 : index
    %5 = arith.index_cast %1 : i32 to index
    %c0_1 = arith.constant 0 : index
    %6 = vector.load %arg2[%c1, %5, %c0_1] : memref<9x16x128xf32, #tpu.memory_space<vmem>>, vector<1x16x128xf32>
    %7 = vector.shape_cast %6 : vector<1x16x128xf32> to vector<16x128xf32>
    %c2 = arith.constant 2 : index
    %8 = arith.index_cast %1 : i32 to index
    %c0_2 = arith.constant 0 : index
    %9 = vector.load %arg2[%c2, %8, %c0_2] : memref<9x16x128xf32, #tpu.memory_space<vmem>>, vector<1x16x128xf32>
    %10 = vector.shape_cast %9 : vector<1x16x128xf32> to vector<16x128xf32>
    %c3 = arith.constant 3 : index
    %11 = arith.index_cast %1 : i32 to index
    %c0_3 = arith.constant 0 : index
    %12 = vector.load %arg2[%c3, %11, %c0_3] : memref<9x16x128xf32, #tpu.memory_space<vmem>>, vector<1x16x128xf32>
    %13 = vector.shape_cast %12 : vector<1x16x128xf32> to vector<16x128xf32>
    %c4 = arith.constant 4 : index
    %14 = arith.index_cast %1 : i32 to index
    %c0_4 = arith.constant 0 : index
    %15 = vector.load %arg2[%c4, %14, %c0_4] : memref<9x16x128xf32, #tpu.memory_space<vmem>>, vector<1x16x128xf32>
    %16 = vector.shape_cast %15 : vector<1x16x128xf32> to vector<16x128xf32>
    %c5 = arith.constant 5 : index
    %17 = arith.index_cast %1 : i32 to index
    %c0_5 = arith.constant 0 : index
    %18 = vector.load %arg2[%c5, %17, %c0_5] : memref<9x16x128xf32, #tpu.memory_space<vmem>>, vector<1x16x128xf32>
    %19 = vector.shape_cast %18 : vector<1x16x128xf32> to vector<16x128xf32>
    %c6 = arith.constant 6 : index
    %20 = arith.index_cast %1 : i32 to index
    %c0_6 = arith.constant 0 : index
    %21 = vector.load %arg2[%c6, %20, %c0_6] : memref<9x16x128xf32, #tpu.memory_space<vmem>>, vector<1x16x128xf32>
    %22 = vector.shape_cast %21 : vector<1x16x128xf32> to vector<16x128xf32>
    %c7 = arith.constant 7 : index
    %23 = arith.index_cast %1 : i32 to index
    %c0_7 = arith.constant 0 : index
    %24 = vector.load %arg2[%c7, %23, %c0_7] : memref<9x16x128xf32, #tpu.memory_space<vmem>>, vector<1x16x128xf32>
    %25 = vector.shape_cast %24 : vector<1x16x128xf32> to vector<16x128xf32>
    %c8 = arith.constant 8 : index
    %26 = arith.index_cast %1 : i32 to index
    %c0_8 = arith.constant 0 : index
    %27 = vector.load %arg2[%c8, %26, %c0_8] : memref<9x16x128xf32, #tpu.memory_space<vmem>>, vector<1x16x128xf32>
    %28 = vector.shape_cast %27 : vector<1x16x128xf32> to vector<16x128xf32>
    %c54 = arith.constant 54 : index
    %29 = memref.load %arg1[%c54] : memref<85xf32, #tpu.memory_space<smem>>
    %c0_9 = arith.constant 0 : index
    %30 = memref.load %arg1[%c0_9] : memref<85xf32, #tpu.memory_space<smem>>
    %31 = vector.broadcast %30 : f32 to vector<16x128xf32>
    %32 = arith.mulf %31, %4 : vector<16x128xf32>
    %33 = vector.broadcast %29 : f32 to vector<16x128xf32>
    %34 = arith.addf %33, %32 : vector<16x128xf32>
    %c1_10 = arith.constant 1 : index
    %35 = memref.load %arg1[%c1_10] : memref<85xf32, #tpu.memory_space<smem>>
    %36 = vector.broadcast %35 : f32 to vector<16x128xf32>
    %37 = arith.mulf %36, %7 : vector<16x128xf32>
    %38 = arith.addf %34, %37 : vector<16x128xf32>
    %c2_11 = arith.constant 2 : index
    %39 = memref.load %arg1[%c2_11] : memref<85xf32, #tpu.memory_space<smem>>
    %40 = vector.broadcast %39 : f32 to vector<16x128xf32>
    %41 = arith.mulf %40, %10 : vector<16x128xf32>
    %42 = arith.addf %38, %41 : vector<16x128xf32>
    %c3_12 = arith.constant 3 : index
    %43 = memref.load %arg1[%c3_12] : memref<85xf32, #tpu.memory_space<smem>>
    %44 = vector.broadcast %43 : f32 to vector<16x128xf32>
    %45 = arith.mulf %44, %13 : vector<16x128xf32>
    %46 = arith.addf %42, %45 : vector<16x128xf32>
    %c4_13 = arith.constant 4 : index
    %47 = memref.load %arg1[%c4_13] : memref<85xf32, #tpu.memory_space<smem>>
    %48 = vector.broadcast %47 : f32 to vector<16x128xf32>
    %49 = arith.mulf %48, %16 : vector<16x128xf32>
    %50 = arith.addf %46, %49 : vector<16x128xf32>
    %c5_14 = arith.constant 5 : index
    %51 = memref.load %arg1[%c5_14] : memref<85xf32, #tpu.memory_space<smem>>
    %52 = vector.broadcast %51 : f32 to vector<16x128xf32>
    %53 = arith.mulf %52, %19 : vector<16x128xf32>
    %54 = arith.addf %50, %53 : vector<16x128xf32>
    %c6_15 = arith.constant 6 : index
    %55 = memref.load %arg1[%c6_15] : memref<85xf32, #tpu.memory_space<smem>>
    %56 = vector.broadcast %55 : f32 to vector<16x128xf32>
    %57 = arith.mulf %56, %22 : vector<16x128xf32>
    %58 = arith.addf %54, %57 : vector<16x128xf32>
    %c7_16 = arith.constant 7 : index
    %59 = memref.load %arg1[%c7_16] : memref<85xf32, #tpu.memory_space<smem>>
    %60 = vector.broadcast %59 : f32 to vector<16x128xf32>
    %61 = arith.mulf %60, %25 : vector<16x128xf32>
    %62 = arith.addf %58, %61 : vector<16x128xf32>
    %c8_17 = arith.constant 8 : index
    %63 = memref.load %arg1[%c8_17] : memref<85xf32, #tpu.memory_space<smem>>
    %64 = vector.broadcast %63 : f32 to vector<16x128xf32>
    %65 = arith.mulf %64, %28 : vector<16x128xf32>
    %66 = arith.addf %62, %65 : vector<16x128xf32>
    %cst = arith.constant 0.000000e+00 : f32
    %67 = vector.broadcast %cst : f32 to vector<16x128xf32>
    %68 = arith.maximumf %66, %67 : vector<16x128xf32>
    %c55 = arith.constant 55 : index
    %69 = memref.load %arg1[%c55] : memref<85xf32, #tpu.memory_space<smem>>
    %c9 = arith.constant 9 : index
    %70 = memref.load %arg1[%c9] : memref<85xf32, #tpu.memory_space<smem>>
    %71 = vector.broadcast %70 : f32 to vector<16x128xf32>
    %72 = arith.mulf %71, %4 : vector<16x128xf32>
    %73 = vector.broadcast %69 : f32 to vector<16x128xf32>
    %74 = arith.addf %73, %72 : vector<16x128xf32>
    %c10 = arith.constant 10 : index
    %75 = memref.load %arg1[%c10] : memref<85xf32, #tpu.memory_space<smem>>
    %76 = vector.broadcast %75 : f32 to vector<16x128xf32>
    %77 = arith.mulf %76, %7 : vector<16x128xf32>
    %78 = arith.addf %74, %77 : vector<16x128xf32>
    %c11 = arith.constant 11 : index
    %79 = memref.load %arg1[%c11] : memref<85xf32, #tpu.memory_space<smem>>
    %80 = vector.broadcast %79 : f32 to vector<16x128xf32>
    %81 = arith.mulf %80, %10 : vector<16x128xf32>
    %82 = arith.addf %78, %81 : vector<16x128xf32>
    %c12 = arith.constant 12 : index
    %83 = memref.load %arg1[%c12] : memref<85xf32, #tpu.memory_space<smem>>
    %84 = vector.broadcast %83 : f32 to vector<16x128xf32>
    %85 = arith.mulf %84, %13 : vector<16x128xf32>
    %86 = arith.addf %82, %85 : vector<16x128xf32>
    %c13 = arith.constant 13 : index
    %87 = memref.load %arg1[%c13] : memref<85xf32, #tpu.memory_space<smem>>
    %88 = vector.broadcast %87 : f32 to vector<16x128xf32>
    %89 = arith.mulf %88, %16 : vector<16x128xf32>
    %90 = arith.addf %86, %89 : vector<16x128xf32>
    %c14 = arith.constant 14 : index
    %91 = memref.load %arg1[%c14] : memref<85xf32, #tpu.memory_space<smem>>
    %92 = vector.broadcast %91 : f32 to vector<16x128xf32>
    %93 = arith.mulf %92, %19 : vector<16x128xf32>
    %94 = arith.addf %90, %93 : vector<16x128xf32>
    %c15 = arith.constant 15 : index
    %95 = memref.load %arg1[%c15] : memref<85xf32, #tpu.memory_space<smem>>
    %96 = vector.broadcast %95 : f32 to vector<16x128xf32>
    %97 = arith.mulf %96, %22 : vector<16x128xf32>
    %98 = arith.addf %94, %97 : vector<16x128xf32>
    %c16 = arith.constant 16 : index
    %99 = memref.load %arg1[%c16] : memref<85xf32, #tpu.memory_space<smem>>
    %100 = vector.broadcast %99 : f32 to vector<16x128xf32>
    %101 = arith.mulf %100, %25 : vector<16x128xf32>
    %102 = arith.addf %98, %101 : vector<16x128xf32>
    %c17 = arith.constant 17 : index
    %103 = memref.load %arg1[%c17] : memref<85xf32, #tpu.memory_space<smem>>
    %104 = vector.broadcast %103 : f32 to vector<16x128xf32>
    %105 = arith.mulf %104, %28 : vector<16x128xf32>
    %106 = arith.addf %102, %105 : vector<16x128xf32>
    %cst_18 = arith.constant 0.000000e+00 : f32
    %107 = vector.broadcast %cst_18 : f32 to vector<16x128xf32>
    %108 = arith.maximumf %106, %107 : vector<16x128xf32>
    %c56 = arith.constant 56 : index
    %109 = memref.load %arg1[%c56] : memref<85xf32, #tpu.memory_space<smem>>
    %c18 = arith.constant 18 : index
    %110 = memref.load %arg1[%c18] : memref<85xf32, #tpu.memory_space<smem>>
    %111 = vector.broadcast %110 : f32 to vector<16x128xf32>
    %112 = arith.mulf %111, %4 : vector<16x128xf32>
    %113 = vector.broadcast %109 : f32 to vector<16x128xf32>
    %114 = arith.addf %113, %112 : vector<16x128xf32>
    %c19 = arith.constant 19 : index
    %115 = memref.load %arg1[%c19] : memref<85xf32, #tpu.memory_space<smem>>
    %116 = vector.broadcast %115 : f32 to vector<16x128xf32>
    %117 = arith.mulf %116, %7 : vector<16x128xf32>
    %118 = arith.addf %114, %117 : vector<16x128xf32>
    %c20 = arith.constant 20 : index
    %119 = memref.load %arg1[%c20] : memref<85xf32, #tpu.memory_space<smem>>
    %120 = vector.broadcast %119 : f32 to vector<16x128xf32>
    %121 = arith.mulf %120, %10 : vector<16x128xf32>
    %122 = arith.addf %118, %121 : vector<16x128xf32>
    %c21 = arith.constant 21 : index
    %123 = memref.load %arg1[%c21] : memref<85xf32, #tpu.memory_space<smem>>
    %124 = vector.broadcast %123 : f32 to vector<16x128xf32>
    %125 = arith.mulf %124, %13 : vector<16x128xf32>
    %126 = arith.addf %122, %125 : vector<16x128xf32>
    %c22 = arith.constant 22 : index
    %127 = memref.load %arg1[%c22] : memref<85xf32, #tpu.memory_space<smem>>
    %128 = vector.broadcast %127 : f32 to vector<16x128xf32>
    %129 = arith.mulf %128, %16 : vector<16x128xf32>
    %130 = arith.addf %126, %129 : vector<16x128xf32>
    %c23 = arith.constant 23 : index
    %131 = memref.load %arg1[%c23] : memref<85xf32, #tpu.memory_space<smem>>
    %132 = vector.broadcast %131 : f32 to vector<16x128xf32>
    %133 = arith.mulf %132, %19 : vector<16x128xf32>
    %134 = arith.addf %130, %133 : vector<16x128xf32>
    %c24 = arith.constant 24 : index
    %135 = memref.load %arg1[%c24] : memref<85xf32, #tpu.memory_space<smem>>
    %136 = vector.broadcast %135 : f32 to vector<16x128xf32>
    %137 = arith.mulf %136, %22 : vector<16x128xf32>
    %138 = arith.addf %134, %137 : vector<16x128xf32>
    %c25 = arith.constant 25 : index
    %139 = memref.load %arg1[%c25] : memref<85xf32, #tpu.memory_space<smem>>
    %140 = vector.broadcast %139 : f32 to vector<16x128xf32>
    %141 = arith.mulf %140, %25 : vector<16x128xf32>
    %142 = arith.addf %138, %141 : vector<16x128xf32>
    %c26 = arith.constant 26 : index
    %143 = memref.load %arg1[%c26] : memref<85xf32, #tpu.memory_space<smem>>
    %144 = vector.broadcast %143 : f32 to vector<16x128xf32>
    %145 = arith.mulf %144, %28 : vector<16x128xf32>
    %146 = arith.addf %142, %145 : vector<16x128xf32>
    %cst_19 = arith.constant 0.000000e+00 : f32
    %147 = vector.broadcast %cst_19 : f32 to vector<16x128xf32>
    %148 = arith.maximumf %146, %147 : vector<16x128xf32>
    %c57 = arith.constant 57 : index
    %149 = memref.load %arg1[%c57] : memref<85xf32, #tpu.memory_space<smem>>
    %c27 = arith.constant 27 : index
    %150 = memref.load %arg1[%c27] : memref<85xf32, #tpu.memory_space<smem>>
    %151 = vector.broadcast %150 : f32 to vector<16x128xf32>
    %152 = arith.mulf %151, %4 : vector<16x128xf32>
    %153 = vector.broadcast %149 : f32 to vector<16x128xf32>
    %154 = arith.addf %153, %152 : vector<16x128xf32>
    %c28 = arith.constant 28 : index
    %155 = memref.load %arg1[%c28] : memref<85xf32, #tpu.memory_space<smem>>
    %156 = vector.broadcast %155 : f32 to vector<16x128xf32>
    %157 = arith.mulf %156, %7 : vector<16x128xf32>
    %158 = arith.addf %154, %157 : vector<16x128xf32>
    %c29 = arith.constant 29 : index
    %159 = memref.load %arg1[%c29] : memref<85xf32, #tpu.memory_space<smem>>
    %160 = vector.broadcast %159 : f32 to vector<16x128xf32>
    %161 = arith.mulf %160, %10 : vector<16x128xf32>
    %162 = arith.addf %158, %161 : vector<16x128xf32>
    %c30 = arith.constant 30 : index
    %163 = memref.load %arg1[%c30] : memref<85xf32, #tpu.memory_space<smem>>
    %164 = vector.broadcast %163 : f32 to vector<16x128xf32>
    %165 = arith.mulf %164, %13 : vector<16x128xf32>
    %166 = arith.addf %162, %165 : vector<16x128xf32>
    %c31 = arith.constant 31 : index
    %167 = memref.load %arg1[%c31] : memref<85xf32, #tpu.memory_space<smem>>
    %168 = vector.broadcast %167 : f32 to vector<16x128xf32>
    %169 = arith.mulf %168, %16 : vector<16x128xf32>
    %170 = arith.addf %166, %169 : vector<16x128xf32>
    %c32 = arith.constant 32 : index
    %171 = memref.load %arg1[%c32] : memref<85xf32, #tpu.memory_space<smem>>
    %172 = vector.broadcast %171 : f32 to vector<16x128xf32>
    %173 = arith.mulf %172, %19 : vector<16x128xf32>
    %174 = arith.addf %170, %173 : vector<16x128xf32>
    %c33 = arith.constant 33 : index
    %175 = memref.load %arg1[%c33] : memref<85xf32, #tpu.memory_space<smem>>
    %176 = vector.broadcast %175 : f32 to vector<16x128xf32>
    %177 = arith.mulf %176, %22 : vector<16x128xf32>
    %178 = arith.addf %174, %177 : vector<16x128xf32>
    %c34 = arith.constant 34 : index
    %179 = memref.load %arg1[%c34] : memref<85xf32, #tpu.memory_space<smem>>
    %180 = vector.broadcast %179 : f32 to vector<16x128xf32>
    %181 = arith.mulf %180, %25 : vector<16x128xf32>
    %182 = arith.addf %178, %181 : vector<16x128xf32>
    %c35 = arith.constant 35 : index
    %183 = memref.load %arg1[%c35] : memref<85xf32, #tpu.memory_space<smem>>
    %184 = vector.broadcast %183 : f32 to vector<16x128xf32>
    %185 = arith.mulf %184, %28 : vector<16x128xf32>
    %186 = arith.addf %182, %185 : vector<16x128xf32>
    %cst_20 = arith.constant 0.000000e+00 : f32
    %187 = vector.broadcast %cst_20 : f32 to vector<16x128xf32>
    %188 = arith.maximumf %186, %187 : vector<16x128xf32>
    %c58 = arith.constant 58 : index
    %189 = memref.load %arg1[%c58] : memref<85xf32, #tpu.memory_space<smem>>
    %c36 = arith.constant 36 : index
    %190 = memref.load %arg1[%c36] : memref<85xf32, #tpu.memory_space<smem>>
    %191 = vector.broadcast %190 : f32 to vector<16x128xf32>
    %192 = arith.mulf %191, %4 : vector<16x128xf32>
    %193 = vector.broadcast %189 : f32 to vector<16x128xf32>
    %194 = arith.addf %193, %192 : vector<16x128xf32>
    %c37 = arith.constant 37 : index
    %195 = memref.load %arg1[%c37] : memref<85xf32, #tpu.memory_space<smem>>
    %196 = vector.broadcast %195 : f32 to vector<16x128xf32>
    %197 = arith.mulf %196, %7 : vector<16x128xf32>
    %198 = arith.addf %194, %197 : vector<16x128xf32>
    %c38 = arith.constant 38 : index
    %199 = memref.load %arg1[%c38] : memref<85xf32, #tpu.memory_space<smem>>
    %200 = vector.broadcast %199 : f32 to vector<16x128xf32>
    %201 = arith.mulf %200, %10 : vector<16x128xf32>
    %202 = arith.addf %198, %201 : vector<16x128xf32>
    %c39 = arith.constant 39 : index
    %203 = memref.load %arg1[%c39] : memref<85xf32, #tpu.memory_space<smem>>
    %204 = vector.broadcast %203 : f32 to vector<16x128xf32>
    %205 = arith.mulf %204, %13 : vector<16x128xf32>
    %206 = arith.addf %202, %205 : vector<16x128xf32>
    %c40 = arith.constant 40 : index
    %207 = memref.load %arg1[%c40] : memref<85xf32, #tpu.memory_space<smem>>
    %208 = vector.broadcast %207 : f32 to vector<16x128xf32>
    %209 = arith.mulf %208, %16 : vector<16x128xf32>
    %210 = arith.addf %206, %209 : vector<16x128xf32>
    %c41 = arith.constant 41 : index
    %211 = memref.load %arg1[%c41] : memref<85xf32, #tpu.memory_space<smem>>
    %212 = vector.broadcast %211 : f32 to vector<16x128xf32>
    %213 = arith.mulf %212, %19 : vector<16x128xf32>
    %214 = arith.addf %210, %213 : vector<16x128xf32>
    %c42 = arith.constant 42 : index
    %215 = memref.load %arg1[%c42] : memref<85xf32, #tpu.memory_space<smem>>
    %216 = vector.broadcast %215 : f32 to vector<16x128xf32>
    %217 = arith.mulf %216, %22 : vector<16x128xf32>
    %218 = arith.addf %214, %217 : vector<16x128xf32>
    %c43 = arith.constant 43 : index
    %219 = memref.load %arg1[%c43] : memref<85xf32, #tpu.memory_space<smem>>
    %220 = vector.broadcast %219 : f32 to vector<16x128xf32>
    %221 = arith.mulf %220, %25 : vector<16x128xf32>
    %222 = arith.addf %218, %221 : vector<16x128xf32>
    %c44 = arith.constant 44 : index
    %223 = memref.load %arg1[%c44] : memref<85xf32, #tpu.memory_space<smem>>
    %224 = vector.broadcast %223 : f32 to vector<16x128xf32>
    %225 = arith.mulf %224, %28 : vector<16x128xf32>
    %226 = arith.addf %222, %225 : vector<16x128xf32>
    %cst_21 = arith.constant 0.000000e+00 : f32
    %227 = vector.broadcast %cst_21 : f32 to vector<16x128xf32>
    %228 = arith.maximumf %226, %227 : vector<16x128xf32>
    %c59 = arith.constant 59 : index
    %229 = memref.load %arg1[%c59] : memref<85xf32, #tpu.memory_space<smem>>
    %c45 = arith.constant 45 : index
    %230 = memref.load %arg1[%c45] : memref<85xf32, #tpu.memory_space<smem>>
    %231 = vector.broadcast %230 : f32 to vector<16x128xf32>
    %232 = arith.mulf %231, %4 : vector<16x128xf32>
    %233 = vector.broadcast %229 : f32 to vector<16x128xf32>
    %234 = arith.addf %233, %232 : vector<16x128xf32>
    %c46 = arith.constant 46 : index
    %235 = memref.load %arg1[%c46] : memref<85xf32, #tpu.memory_space<smem>>
    %236 = vector.broadcast %235 : f32 to vector<16x128xf32>
    %237 = arith.mulf %236, %7 : vector<16x128xf32>
    %238 = arith.addf %234, %237 : vector<16x128xf32>
    %c47 = arith.constant 47 : index
    %239 = memref.load %arg1[%c47] : memref<85xf32, #tpu.memory_space<smem>>
    %240 = vector.broadcast %239 : f32 to vector<16x128xf32>
    %241 = arith.mulf %240, %10 : vector<16x128xf32>
    %242 = arith.addf %238, %241 : vector<16x128xf32>
    %c48 = arith.constant 48 : index
    %243 = memref.load %arg1[%c48] : memref<85xf32, #tpu.memory_space<smem>>
    %244 = vector.broadcast %243 : f32 to vector<16x128xf32>
    %245 = arith.mulf %244, %13 : vector<16x128xf32>
    %246 = arith.addf %242, %245 : vector<16x128xf32>
    %c49 = arith.constant 49 : index
    %247 = memref.load %arg1[%c49] : memref<85xf32, #tpu.memory_space<smem>>
    %248 = vector.broadcast %247 : f32 to vector<16x128xf32>
    %249 = arith.mulf %248, %16 : vector<16x128xf32>
    %250 = arith.addf %246, %249 : vector<16x128xf32>
    %c50 = arith.constant 50 : index
    %251 = memref.load %arg1[%c50] : memref<85xf32, #tpu.memory_space<smem>>
    %252 = vector.broadcast %251 : f32 to vector<16x128xf32>
    %253 = arith.mulf %252, %19 : vector<16x128xf32>
    %254 = arith.addf %250, %253 : vector<16x128xf32>
    %c51 = arith.constant 51 : index
    %255 = memref.load %arg1[%c51] : memref<85xf32, #tpu.memory_space<smem>>
    %256 = vector.broadcast %255 : f32 to vector<16x128xf32>
    %257 = arith.mulf %256, %22 : vector<16x128xf32>
    %258 = arith.addf %254, %257 : vector<16x128xf32>
    %c52 = arith.constant 52 : index
    %259 = memref.load %arg1[%c52] : memref<85xf32, #tpu.memory_space<smem>>
    %260 = vector.broadcast %259 : f32 to vector<16x128xf32>
    %261 = arith.mulf %260, %25 : vector<16x128xf32>
    %262 = arith.addf %258, %261 : vector<16x128xf32>
    %c53 = arith.constant 53 : index
    %263 = memref.load %arg1[%c53] : memref<85xf32, #tpu.memory_space<smem>>
    %264 = vector.broadcast %263 : f32 to vector<16x128xf32>
    %265 = arith.mulf %264, %28 : vector<16x128xf32>
    %266 = arith.addf %262, %265 : vector<16x128xf32>
    %cst_22 = arith.constant 0.000000e+00 : f32
    %267 = vector.broadcast %cst_22 : f32 to vector<16x128xf32>
    %268 = arith.maximumf %266, %267 : vector<16x128xf32>
    %c78 = arith.constant 78 : index
    %269 = memref.load %arg1[%c78] : memref<85xf32, #tpu.memory_space<smem>>
    %c60 = arith.constant 60 : index
    %270 = memref.load %arg1[%c60] : memref<85xf32, #tpu.memory_space<smem>>
    %271 = vector.broadcast %270 : f32 to vector<16x128xf32>
    %272 = arith.mulf %271, %68 : vector<16x128xf32>
    %273 = vector.broadcast %269 : f32 to vector<16x128xf32>
    %274 = arith.addf %273, %272 : vector<16x128xf32>
    %c61 = arith.constant 61 : index
    %275 = memref.load %arg1[%c61] : memref<85xf32, #tpu.memory_space<smem>>
    %276 = vector.broadcast %275 : f32 to vector<16x128xf32>
    %277 = arith.mulf %276, %108 : vector<16x128xf32>
    %278 = arith.addf %274, %277 : vector<16x128xf32>
    %c62 = arith.constant 62 : index
    %279 = memref.load %arg1[%c62] : memref<85xf32, #tpu.memory_space<smem>>
    %280 = vector.broadcast %279 : f32 to vector<16x128xf32>
    %281 = arith.mulf %280, %148 : vector<16x128xf32>
    %282 = arith.addf %278, %281 : vector<16x128xf32>
    %c63 = arith.constant 63 : index
    %283 = memref.load %arg1[%c63] : memref<85xf32, #tpu.memory_space<smem>>
    %284 = vector.broadcast %283 : f32 to vector<16x128xf32>
    %285 = arith.mulf %284, %188 : vector<16x128xf32>
    %286 = arith.addf %282, %285 : vector<16x128xf32>
    %c64 = arith.constant 64 : index
    %287 = memref.load %arg1[%c64] : memref<85xf32, #tpu.memory_space<smem>>
    %288 = vector.broadcast %287 : f32 to vector<16x128xf32>
    %289 = arith.mulf %288, %228 : vector<16x128xf32>
    %290 = arith.addf %286, %289 : vector<16x128xf32>
    %c65 = arith.constant 65 : index
    %291 = memref.load %arg1[%c65] : memref<85xf32, #tpu.memory_space<smem>>
    %292 = vector.broadcast %291 : f32 to vector<16x128xf32>
    %293 = arith.mulf %292, %268 : vector<16x128xf32>
    %294 = arith.addf %290, %293 : vector<16x128xf32>
    %cst_23 = arith.constant 0.000000e+00 : f32
    %295 = vector.broadcast %cst_23 : f32 to vector<16x128xf32>
    %296 = arith.maximumf %294, %295 : vector<16x128xf32>
    %c79 = arith.constant 79 : index
    %297 = memref.load %arg1[%c79] : memref<85xf32, #tpu.memory_space<smem>>
    %c66 = arith.constant 66 : index
    %298 = memref.load %arg1[%c66] : memref<85xf32, #tpu.memory_space<smem>>
    %299 = vector.broadcast %298 : f32 to vector<16x128xf32>
    %300 = arith.mulf %299, %68 : vector<16x128xf32>
    %301 = vector.broadcast %297 : f32 to vector<16x128xf32>
    %302 = arith.addf %301, %300 : vector<16x128xf32>
    %c67 = arith.constant 67 : index
    %303 = memref.load %arg1[%c67] : memref<85xf32, #tpu.memory_space<smem>>
    %304 = vector.broadcast %303 : f32 to vector<16x128xf32>
    %305 = arith.mulf %304, %108 : vector<16x128xf32>
    %306 = arith.addf %302, %305 : vector<16x128xf32>
    %c68 = arith.constant 68 : index
    %307 = memref.load %arg1[%c68] : memref<85xf32, #tpu.memory_space<smem>>
    %308 = vector.broadcast %307 : f32 to vector<16x128xf32>
    %309 = arith.mulf %308, %148 : vector<16x128xf32>
    %310 = arith.addf %306, %309 : vector<16x128xf32>
    %c69 = arith.constant 69 : index
    %311 = memref.load %arg1[%c69] : memref<85xf32, #tpu.memory_space<smem>>
    %312 = vector.broadcast %311 : f32 to vector<16x128xf32>
    %313 = arith.mulf %312, %188 : vector<16x128xf32>
    %314 = arith.addf %310, %313 : vector<16x128xf32>
    %c70 = arith.constant 70 : index
    %315 = memref.load %arg1[%c70] : memref<85xf32, #tpu.memory_space<smem>>
    %316 = vector.broadcast %315 : f32 to vector<16x128xf32>
    %317 = arith.mulf %316, %228 : vector<16x128xf32>
    %318 = arith.addf %314, %317 : vector<16x128xf32>
    %c71 = arith.constant 71 : index
    %319 = memref.load %arg1[%c71] : memref<85xf32, #tpu.memory_space<smem>>
    %320 = vector.broadcast %319 : f32 to vector<16x128xf32>
    %321 = arith.mulf %320, %268 : vector<16x128xf32>
    %322 = arith.addf %318, %321 : vector<16x128xf32>
    %cst_24 = arith.constant 0.000000e+00 : f32
    %323 = vector.broadcast %cst_24 : f32 to vector<16x128xf32>
    %324 = arith.maximumf %322, %323 : vector<16x128xf32>
    %c80 = arith.constant 80 : index
    %325 = memref.load %arg1[%c80] : memref<85xf32, #tpu.memory_space<smem>>
    %c72 = arith.constant 72 : index
    %326 = memref.load %arg1[%c72] : memref<85xf32, #tpu.memory_space<smem>>
    %327 = vector.broadcast %326 : f32 to vector<16x128xf32>
    %328 = arith.mulf %327, %68 : vector<16x128xf32>
    %329 = vector.broadcast %325 : f32 to vector<16x128xf32>
    %330 = arith.addf %329, %328 : vector<16x128xf32>
    %c73 = arith.constant 73 : index
    %331 = memref.load %arg1[%c73] : memref<85xf32, #tpu.memory_space<smem>>
    %332 = vector.broadcast %331 : f32 to vector<16x128xf32>
    %333 = arith.mulf %332, %108 : vector<16x128xf32>
    %334 = arith.addf %330, %333 : vector<16x128xf32>
    %c74 = arith.constant 74 : index
    %335 = memref.load %arg1[%c74] : memref<85xf32, #tpu.memory_space<smem>>
    %336 = vector.broadcast %335 : f32 to vector<16x128xf32>
    %337 = arith.mulf %336, %148 : vector<16x128xf32>
    %338 = arith.addf %334, %337 : vector<16x128xf32>
    %c75 = arith.constant 75 : index
    %339 = memref.load %arg1[%c75] : memref<85xf32, #tpu.memory_space<smem>>
    %340 = vector.broadcast %339 : f32 to vector<16x128xf32>
    %341 = arith.mulf %340, %188 : vector<16x128xf32>
    %342 = arith.addf %338, %341 : vector<16x128xf32>
    %c76 = arith.constant 76 : index
    %343 = memref.load %arg1[%c76] : memref<85xf32, #tpu.memory_space<smem>>
    %344 = vector.broadcast %343 : f32 to vector<16x128xf32>
    %345 = arith.mulf %344, %228 : vector<16x128xf32>
    %346 = arith.addf %342, %345 : vector<16x128xf32>
    %c77 = arith.constant 77 : index
    %347 = memref.load %arg1[%c77] : memref<85xf32, #tpu.memory_space<smem>>
    %348 = vector.broadcast %347 : f32 to vector<16x128xf32>
    %349 = arith.mulf %348, %268 : vector<16x128xf32>
    %350 = arith.addf %346, %349 : vector<16x128xf32>
    %cst_25 = arith.constant 0.000000e+00 : f32
    %351 = vector.broadcast %cst_25 : f32 to vector<16x128xf32>
    %352 = arith.maximumf %350, %351 : vector<16x128xf32>
    %c84 = arith.constant 84 : index
    %353 = memref.load %arg1[%c84] : memref<85xf32, #tpu.memory_space<smem>>
    %c81 = arith.constant 81 : index
    %354 = memref.load %arg1[%c81] : memref<85xf32, #tpu.memory_space<smem>>
    %355 = vector.broadcast %354 : f32 to vector<16x128xf32>
    %356 = arith.mulf %355, %296 : vector<16x128xf32>
    %357 = vector.broadcast %353 : f32 to vector<16x128xf32>
    %358 = arith.addf %357, %356 : vector<16x128xf32>
    %c82 = arith.constant 82 : index
    %359 = memref.load %arg1[%c82] : memref<85xf32, #tpu.memory_space<smem>>
    %360 = vector.broadcast %359 : f32 to vector<16x128xf32>
    %361 = arith.mulf %360, %324 : vector<16x128xf32>
    %362 = arith.addf %358, %361 : vector<16x128xf32>
    %c83 = arith.constant 83 : index
    %363 = memref.load %arg1[%c83] : memref<85xf32, #tpu.memory_space<smem>>
    %364 = vector.broadcast %363 : f32 to vector<16x128xf32>
    %365 = arith.mulf %364, %352 : vector<16x128xf32>
    %366 = arith.addf %362, %365 : vector<16x128xf32>
    %cst_26 = arith.constant 0.000000e+00 : f32
    %367 = vector.broadcast %cst_26 : f32 to vector<16x128xf32>
    %368 = arith.subf %367, %366 : vector<16x128xf32>
    %369 = math.exp %368 : vector<16x128xf32>
    %cst_27 = arith.constant 1.000000e+00 : f32
    %370 = vector.broadcast %cst_27 : f32 to vector<16x128xf32>
    %371 = arith.addf %370, %369 : vector<16x128xf32>
    %372 = tpu.reciprocal %371 : vector<16x128xf32> -> vector<16x128xf32>
    %373 = arith.index_cast %1 : i32 to index
    %c0_28 = arith.constant 0 : index
    %374 = vector.load %arg3[%373, %c0_28] : memref<16x128xf32, #tpu.memory_space<vmem>>, vector<16x128xf32>
    tpu.vector_store %arg3[%373, %c0_28], %372 {strides = array<i32>} : memref<16x128xf32, #tpu.memory_space<vmem>>, vector<16x128xf32>,
    %c1_i32 = arith.constant 1 : i32
    return
  }
  func.func @transform_0(%arg0: i32) -> i32 {
    %c0_i32 = arith.constant 0 : i32
    %c0_i32_0 = arith.constant 0 : i32
    return %c0_i32 : i32
  }
  func.func @transform_1(%arg0: i32) -> (i32, i32, i32) {
    %c0_i32 = arith.constant 0 : i32
    %c0_i32_0 = arith.constant 0 : i32
    %c0_i32_1 = arith.constant 0 : i32
    return %c0_i32, %arg0, %c0_i32_0 : i32, i32, i32
  }
  func.func @transform_2(%arg0: i32) -> (i32, i32) {
    %c0_i32 = arith.constant 0 : i32
    %c0_i32_0 = arith.constant 0 : i32
    return %arg0, %c0_i32 : i32, i32
  }
}

</mosaic_0001>

<llo_original>
// kernel: mlp_forward.1
$region0: #{mlp_forward.1}
  #allocation0 [shape = 'u32[]', space=smem, size = 0x4, offset = 0x4, fixed_abs, tag = 'smem constant byte address 0x4 - core index']
  #allocation1 [shape = 'u32[144,128]{1,0:T(1,128)}', space=vmem, size = 0x12000, scoped, tag = 'internal scratch']
  %s0 = inlined_call_operand.vmem [shape: f32[85], index: 0, kind: input, shape index: {}]
  %s1 = inlined_call_operand.vmem [shape: f32[9,16,128], index: 1, kind: input, shape index: {}]
  %s2 = inlined_call_operand.vmem [shape: f32[16,128], index: 2, kind: output, shape index: {}]
  %s3 = sld [smem:[#allocation0]]
  $region22: #{mlp_forward.1} parent=0
    _
  %s5 = ssub.s32 1, %s3
  %s6 = scalar_select 0, %s5, %s3
  $region1: #{mlp_forward.1} parent=0
    #allocation2 [shape = 'u8[512]{0}', space=smem, size = 0x200, scoped, tag = 'input window, operand 0, single buffered']
    #allocation3 [shape = 's32[1]{0}', space=sflag, size = 0x4, scoped, tag = 'scoped memory for mlp_forward.1']
    %7 = vsyncpa [#allocation3], 0
    // Predicated region
    $region2: #{mlp_forward.1} parent=1 // pred_check
      _
    $region3: #{mlp_forward.1} parent=1 // pred_check_branch
      %9 = sbr.rel (0) target = $region5
    $region4: #{mlp_forward.1} parent=1 // pred_region
      %s11 = ssub.s32 16, 16
      %12 = vsyncadd [#allocation3], %s11
      %s14 = sshll.u32 %s0, 4
      %s15 = int_to_ptr.vmem [resolvable:$true] %s14
      %17 = dma.vmem_to_smem %s15, 16, [#allocation2], [#allocation3]
    $region5: #{mlp_forward.1} parent=1 // pred_fallthru
      _
    // Predicated region
    $region6: #{mlp_forward.1} parent=1 // pred_check
      _
    $region7: #{mlp_forward.1} parent=1 // pred_check_branch
      %19 = sbr.rel (0) target = $region9
    $region8: #{mlp_forward.1} parent=1 // pred_region
      _
    $region9: #{mlp_forward.1} parent=1 // pred_fallthru
      _
    // Predicated region
    $region10: #{mlp_forward.1} parent=1 // pred_check
      _
    $region11: #{mlp_forward.1} parent=1 // pred_check_branch
      %21 = sbr.rel (0) target = $region13
    $region12: #{mlp_forward.1} parent=1 // pred_region
      %22 = dma.done [#allocation3], 16
    $region13: #{mlp_forward.1} parent=1 // pred_fallthru
      _
    %23 = sfence
    %v24 = vld [vmem:[%s1] sm:$0xff]
    %v25 = vld [vmem:[%s1 + $0x8] sm:$0xff]
    %s26 = sadd.s32 0, 16
    %s27 = scalar_lea.vmem %s1, %s26
    %v28 = vld [vmem:[%s27] sm:$0xff]
    %v29 = vld [vmem:[%s27 + $0x8] sm:$0xff]
    %s30 = sadd.s32 0, 32
    %s31 = scalar_lea.vmem %s1, %s30
    %v32 = vld [vmem:[%s31] sm:$0xff]
    %v33 = vld [vmem:[%s31 + $0x8] sm:$0xff]
    %s34 = sadd.s32 0, 48
    %s35 = scalar_lea.vmem %s1, %s34
    %v36 = vld [vmem:[%s35] sm:$0xff]
    %v37 = vld [vmem:[%s35 + $0x8] sm:$0xff]
    %s38 = sadd.s32 0, 64
    %s39 = scalar_lea.vmem %s1, %s38
    %v40 = vld [vmem:[%s39] sm:$0xff]
    %v41 = vld [vmem:[%s39 + $0x8] sm:$0xff]
    %s42 = sadd.s32 0, 80
    %s43 = scalar_lea.vmem %s1, %s42
    %v44 = vld [vmem:[%s43] sm:$0xff]
    %v45 = vld [vmem:[%s43 + $0x8] sm:$0xff]
    %s46 = sadd.s32 0, 96
    %s47 = scalar_lea.vmem %s1, %s46
    %v48 = vld [vmem:[%s47] sm:$0xff]
    %v49 = vld [vmem:[%s47 + $0x8] sm:$0xff]
    %s50 = sadd.s32 0, 112
    %s51 = scalar_lea.vmem %s1, %s50
    %v52 = vld [vmem:[%s51] sm:$0xff]
    %v53 = vld [vmem:[%s51 + $0x8] sm:$0xff]
    %s54 = sadd.s32 0, 128
    %s55 = scalar_lea.vmem %s1, %s54
    %v56 = vld [vmem:[%s55] sm:$0xff]
    %v57 = vld [vmem:[%s55 + $0x8] sm:$0xff]
    %s58 = sld [smem:[#allocation2 + $0x36]]
    %s59 = sld [smem:[#allocation2]]
    %v60 = vstv %s59
    %v61 = vmul.f32 %v60, %v24
    %v62 = vmul.f32 %v60, %v25
    %v63 = vstv %s58
    %v64 = vadd.f32 %v63, %v61
    %v65 = vadd.f32 %v63, %v62
    %s66 = sld [smem:[#allocation2 + $0x1]]
    %v67 = vstv %s66
    %v68 = vmul.f32 %v67, %v28
    %v69 = vmul.f32 %v67, %v29
    %v70 = vadd.f32 %v64, %v68
    %v71 = vadd.f32 %v65, %v69
    %s72 = sld [smem:[#allocation2 + $0x2]]
    %v73 = vstv %s72
    %v74 = vmul.f32 %v73, %v32
    %v75 = vmul.f32 %v73, %v33
    %v76 = vadd.f32 %v70, %v74
    %v77 = vadd.f32 %v71, %v75
    %s78 = sld [smem:[#allocation2 + $0x3]]
    %v79 = vstv %s78
    %v80 = vmul.f32 %v79, %v36
    %v81 = vmul.f32 %v79, %v37
    %v82 = vadd.f32 %v76, %v80
    %v83 = vadd.f32 %v77, %v81
    %s84 = sld [smem:[#allocation2 + $0x4]]
    %v85 = vstv %s84
    %v86 = vmul.f32 %v85, %v40
    %v87 = vmul.f32 %v85, %v41
    %v88 = vadd.f32 %v82, %v86
    %v89 = vadd.f32 %v83, %v87
    %s90 = sld [smem:[#allocation2 + $0x5]]
    %v91 = vstv %s90
    %v92 = vmul.f32 %v91, %v44
    %v93 = vmul.f32 %v91, %v45
    %v94 = vadd.f32 %v88, %v92
    %v95 = vadd.f32 %v89, %v93
    %s96 = sld [smem:[#allocation2 + $0x6]]
    %v97 = vstv %s96
    %v98 = vmul.f32 %v97, %v48
    %v99 = vmul.f32 %v97, %v49
    %v100 = vadd.f32 %v94, %v98
    %v101 = vadd.f32 %v95, %v99
    %s102 = sld [smem:[#allocation2 + $0x7]]
    %v103 = vstv %s102
    %v104 = vmul.f32 %v103, %v52
    %v105 = vmul.f32 %v103, %v53
    %v106 = vadd.f32 %v100, %v104
    %v107 = vadd.f32 %v101, %v105
    %s108 = sld [smem:[#allocation2 + $0x8]]
    %v109 = vstv %s108
    %v110 = vmul.f32 %v109, %v56
    %v111 = vmul.f32 %v109, %v57
    %v112 = vadd.f32 %v106, %v110
    %v113 = vadd.f32 %v107, %v111
    %v114 = vmax.f32 %v112, 0.0
    %v115 = vmax.f32 %v113, 0.0
    %s116 = sld [smem:[#allocation2 + $0x37]]
    %s117 = sld [smem:[#allocation2 + $0x9]]
    %v118 = vstv %s117
    %v119 = vmul.f32 %v118, %v24
    %v120 = vmul.f32 %v118, %v25
    %v121 = vstv %s116
    %v122 = vadd.f32 %v121, %v119
    %v123 = vadd.f32 %v121, %v120
    %s124 = sld [smem:[#allocation2 + $0xa]]
    %v125 = vstv %s124
    %v126 = vmul.f32 %v125, %v28
    %v127 = vmul.f32 %v125, %v29
    %v128 = vadd.f32 %v122, %v126
    %v129 = vadd.f32 %v123, %v127
    %s130 = sld [smem:[#allocation2 + $0xb]]
    %v131 = vstv %s130
    %v132 = vmul.f32 %v131, %v32
    %v133 = vmul.f32 %v131, %v33
    %v134 = vadd.f32 %v128, %v132
    %v135 = vadd.f32 %v129, %v133
    %s136 = sld [smem:[#allocation2 + $0xc]]
    %v137 = vstv %s136
    %v138 = vmul.f32 %v137, %v36
    %v139 = vmul.f32 %v137, %v37
    %v140 = vadd.f32 %v134, %v138
    %v141 = vadd.f32 %v135, %v139
    %s142 = sld [smem:[#allocation2 + $0xd]]
    %v143 = vstv %s142
    %v144 = vmul.f32 %v143, %v40
    %v145 = vmul.f32 %v143, %v41
    %v146 = vadd.f32 %v140, %v144
    %v147 = vadd.f32 %v141, %v145
    %s148 = sld [smem:[#allocation2 + $0xe]]
    %v149 = vstv %s148
    %v150 = vmul.f32 %v149, %v44
    %v151 = vmul.f32 %v149, %v45
    %v152 = vadd.f32 %v146, %v150
    %v153 = vadd.f32 %v147, %v151
    %s154 = sld [smem:[#allocation2 + $0xf]]
    %v155 = vstv %s154
    %v156 = vmul.f32 %v155, %v48
    %v157 = vmul.f32 %v155, %v49
    %v158 = vadd.f32 %v152, %v156
    %v159 = vadd.f32 %v153, %v157
    %s160 = sld [smem:[#allocation2 + $0x10]]
    %v161 = vstv %s160
    %v162 = vmul.f32 %v161, %v52
    %v163 = vmul.f32 %v161, %v53
    %v164 = vadd.f32 %v158, %v162
    %v165 = vadd.f32 %v159, %v163
    %s166 = sld [smem:[#allocation2 + $0x11]]
    %v167 = vstv %s166
    %v168 = vmul.f32 %v167, %v56
    %v169 = vmul.f32 %v167, %v57
    %v170 = vadd.f32 %v164, %v168
    %v171 = vadd.f32 %v165, %v169
    %v172 = vmax.f32 %v170, 0.0
    %v173 = vmax.f32 %v171, 0.0
    %s174 = sld [smem:[#allocation2 + $0x38]]
    %s175 = sld [smem:[#allocation2 + $0x12]]
    %v176 = vstv %s175
    %v177 = vmul.f32 %v176, %v24
    %v178 = vmul.f32 %v176, %v25
    %v179 = vstv %s174
    %v180 = vadd.f32 %v179, %v177
    %v181 = vadd.f32 %v179, %v178
    %s182 = sld [smem:[#allocation2 + $0x13]]
    %v183 = vstv %s182
    %v184 = vmul.f32 %v183, %v28
    %v185 = vmul.f32 %v183, %v29
    %v186 = vadd.f32 %v180, %v184
    %v187 = vadd.f32 %v181, %v185
    %s188 = sld [smem:[#allocation2 + $0x14]]
    %v189 = vstv %s188
    %v190 = vmul.f32 %v189, %v32
    %v191 = vmul.f32 %v189, %v33
    %v192 = vadd.f32 %v186, %v190
    %v193 = vadd.f32 %v187, %v191
    %s194 = sld [smem:[#allocation2 + $0x15]]
    %v195 = vstv %s194
    %v196 = vmul.f32 %v195, %v36
    %v197 = vmul.f32 %v195, %v37
    %v198 = vadd.f32 %v192, %v196
    %v199 = vadd.f32 %v193, %v197
    %s200 = sld [smem:[#allocation2 + $0x16]]
    %v201 = vstv %s200
    %v202 = vmul.f32 %v201, %v40
    %v203 = vmul.f32 %v201, %v41
    %v204 = vadd.f32 %v198, %v202
    %v205 = vadd.f32 %v199, %v203
    %s206 = sld [smem:[#allocation2 + $0x17]]
    %v207 = vstv %s206
    %v208 = vmul.f32 %v207, %v44
    %v209 = vmul.f32 %v207, %v45
    %v210 = vadd.f32 %v204, %v208
    %v211 = vadd.f32 %v205, %v209
    %s212 = sld [smem:[#allocation2 + $0x18]]
    %v213 = vstv %s212
    %v214 = vmul.f32 %v213, %v48
    %v215 = vmul.f32 %v213, %v49
    %v216 = vadd.f32 %v210, %v214
    %v217 = vadd.f32 %v211, %v215
    %s218 = sld [smem:[#allocation2 + $0x19]]
    %v219 = vstv %s218
    %v220 = vmul.f32 %v219, %v52
    %v221 = vmul.f32 %v219, %v53
    %v222 = vadd.f32 %v216, %v220
    %v223 = vadd.f32 %v217, %v221
    %s224 = sld [smem:[#allocation2 + $0x1a]]
    %v225 = vstv %s224
    %v226 = vmul.f32 %v225, %v56
    %v227 = vmul.f32 %v225, %v57
    %v228 = vadd.f32 %v222, %v226
    %v229 = vadd.f32 %v223, %v227
    %v230 = vmax.f32 %v228, 0.0
    %v231 = vmax.f32 %v229, 0.0
    %s232 = sld [smem:[#allocation2 + $0x39]]
    %s233 = sld [smem:[#allocation2 + $0x1b]]
    %v234 = vstv %s233
    %v235 = vmul.f32 %v234, %v24
    %v236 = vmul.f32 %v234, %v25
    %v237 = vstv %s232
    %v238 = vadd.f32 %v237, %v235
    %v239 = vadd.f32 %v237, %v236
    %s240 = sld [smem:[#allocation2 + $0x1c]]
    %v241 = vstv %s240
    %v242 = vmul.f32 %v241, %v28
    %v243 = vmul.f32 %v241, %v29
    %v244 = vadd.f32 %v238, %v242
    %v245 = vadd.f32 %v239, %v243
    %s246 = sld [smem:[#allocation2 + $0x1d]]
    %v247 = vstv %s246
    %v248 = vmul.f32 %v247, %v32
    %v249 = vmul.f32 %v247, %v33
    %v250 = vadd.f32 %v244, %v248
    %v251 = vadd.f32 %v245, %v249
    %s252 = sld [smem:[#allocation2 + $0x1e]]
    %v253 = vstv %s252
    %v254 = vmul.f32 %v253, %v36
    %v255 = vmul.f32 %v253, %v37
    %v256 = vadd.f32 %v250, %v254
    %v257 = vadd.f32 %v251, %v255
    %s258 = sld [smem:[#allocation2 + $0x1f]]
    %v259 = vstv %s258
    %v260 = vmul.f32 %v259, %v40
    %v261 = vmul.f32 %v259, %v41
    %v262 = vadd.f32 %v256, %v260
    %v263 = vadd.f32 %v257, %v261
    %s264 = sld [smem:[#allocation2 + $0x20]]
    %v265 = vstv %s264
    %v266 = vmul.f32 %v265, %v44
    %v267 = vmul.f32 %v265, %v45
    %v268 = vadd.f32 %v262, %v266
    %v269 = vadd.f32 %v263, %v267
    %s270 = sld [smem:[#allocation2 + $0x21]]
    %v271 = vstv %s270
    %v272 = vmul.f32 %v271, %v48
    %v273 = vmul.f32 %v271, %v49
    %v274 = vadd.f32 %v268, %v272
    %v275 = vadd.f32 %v269, %v273
    %s276 = sld [smem:[#allocation2 + $0x22]]
    %v277 = vstv %s276
    %v278 = vmul.f32 %v277, %v52
    %v279 = vmul.f32 %v277, %v53
    %v280 = vadd.f32 %v274, %v278
    %v281 = vadd.f32 %v275, %v279
    %s282 = sld [smem:[#allocation2 + $0x23]]
    %v283 = vstv %s282
    %v284 = vmul.f32 %v283, %v56
    %v285 = vmul.f32 %v283, %v57
    %v286 = vadd.f32 %v280, %v284
    %v287 = vadd.f32 %v281, %v285
    %v288 = vmax.f32 %v286, 0.0
    %v289 = vmax.f32 %v287, 0.0
    %s290 = sld [smem:[#allocation2 + $0x3a]]
    %s291 = sld [smem:[#allocation2 + $0x24]]
    %v292 = vstv %s291
    %v293 = vmul.f32 %v292, %v24
    %v294 = vmul.f32 %v292, %v25
    %v295 = vstv %s290
    %v296 = vadd.f32 %v295, %v293
    %v297 = vadd.f32 %v295, %v294
    %s298 = sld [smem:[#allocation2 + $0x25]]
    %v299 = vstv %s298
    %v300 = vmul.f32 %v299, %v28
    %v301 = vmul.f32 %v299, %v29
    %v302 = vadd.f32 %v296, %v300
    %v303 = vadd.f32 %v297, %v301
    %s304 = sld [smem:[#allocation2 + $0x26]]
    %v305 = vstv %s304
    %v306 = vmul.f32 %v305, %v32
    %v307 = vmul.f32 %v305, %v33
    %v308 = vadd.f32 %v302, %v306
    %v309 = vadd.f32 %v303, %v307
    %s310 = sld [smem:[#allocation2 + $0x27]]
    %v311 = vstv %s310
    %v312 = vmul.f32 %v311, %v36
    %v313 = vmul.f32 %v311, %v37
    %v314 = vadd.f32 %v308, %v312
    %v315 = vadd.f32 %v309, %v313
    %s316 = sld [smem:[#allocation2 + $0x28]]
    %v317 = vstv %s316
    %v318 = vmul.f32 %v317, %v40
    %v319 = vmul.f32 %v317, %v41
    %v320 = vadd.f32 %v314, %v318
    %v321 = vadd.f32 %v315, %v319
    %s322 = sld [smem:[#allocation2 + $0x29]]
    %v323 = vstv %s322
    %v324 = vmul.f32 %v323, %v44
    %v325 = vmul.f32 %v323, %v45
    %v326 = vadd.f32 %v320, %v324
    %v327 = vadd.f32 %v321, %v325
    %s328 = sld [smem:[#allocation2 + $0x2a]]
    %v329 = vstv %s328
    %v330 = vmul.f32 %v329, %v48
    %v331 = vmul.f32 %v329, %v49
    %v332 = vadd.f32 %v326, %v330
    %v333 = vadd.f32 %v327, %v331
    %s334 = sld [smem:[#allocation2 + $0x2b]]
    %v335 = vstv %s334
    %v336 = vmul.f32 %v335, %v52
    %v337 = vmul.f32 %v335, %v53
    %v338 = vadd.f32 %v332, %v336
    %v339 = vadd.f32 %v333, %v337
    %s340 = sld [smem:[#allocation2 + $0x2c]]
    %v341 = vstv %s340
    %v342 = vmul.f32 %v341, %v56
    %v343 = vmul.f32 %v341, %v57
    %v344 = vadd.f32 %v338, %v342
    %v345 = vadd.f32 %v339, %v343
    %v346 = vmax.f32 %v344, 0.0
    %v347 = vmax.f32 %v345, 0.0
    %s348 = sld [smem:[#allocation2 + $0x3b]]
    %s349 = sld [smem:[#allocation2 + $0x2d]]
    %v350 = vstv %s349
    %v351 = vmul.f32 %v350, %v24
    %v352 = vmul.f32 %v350, %v25
    %v353 = vstv %s348
    %v354 = vadd.f32 %v353, %v351
    %v355 = vadd.f32 %v353, %v352
    %s356 = sld [smem:[#allocation2 + $0x2e]]
    %v357 = vstv %s356
    %v358 = vmul.f32 %v357, %v28
    %v359 = vmul.f32 %v357, %v29
    %v360 = vadd.f32 %v354, %v358
    %v361 = vadd.f32 %v355, %v359
    %s362 = sld [smem:[#allocation2 + $0x2f]]
    %v363 = vstv %s362
    %v364 = vmul.f32 %v363, %v32
    %v365 = vmul.f32 %v363, %v33
    %v366 = vadd.f32 %v360, %v364
    %v367 = vadd.f32 %v361, %v365
    %s368 = sld [smem:[#allocation2 + $0x30]]
    %v369 = vstv %s368
    %v370 = vmul.f32 %v369, %v36
    %v371 = vmul.f32 %v369, %v37
    %v372 = vadd.f32 %v366, %v370
    %v373 = vadd.f32 %v367, %v371
    %s374 = sld [smem:[#allocation2 + $0x31]]
    %v375 = vstv %s374
    %v376 = vmul.f32 %v375, %v40
    %v377 = vmul.f32 %v375, %v41
    %v378 = vadd.f32 %v372, %v376
    %v379 = vadd.f32 %v373, %v377
    %s380 = sld [smem:[#allocation2 + $0x32]]
    %v381 = vstv %s380
    %v382 = vmul.f32 %v381, %v44
    %v383 = vmul.f32 %v381, %v45
    %v384 = vadd.f32 %v378, %v382
    %v385 = vadd.f32 %v379, %v383
    %s386 = sld [smem:[#allocation2 + $0x33]]
    %v387 = vstv %s386
    %v388 = vmul.f32 %v387, %v48
    %v389 = vmul.f32 %v387, %v49
    %v390 = vadd.f32 %v384, %v388
    %v391 = vadd.f32 %v385, %v389
    %s392 = sld [smem:[#allocation2 + $0x34]]
    %v393 = vstv %s392
    %v394 = vmul.f32 %v393, %v52
    %v395 = vmul.f32 %v393, %v53
    %v396 = vadd.f32 %v390, %v394
    %v397 = vadd.f32 %v391, %v395
    %s398 = sld [smem:[#allocation2 + $0x35]]
    %v399 = vstv %s398
    %v400 = vmul.f32 %v399, %v56
    %v401 = vmul.f32 %v399, %v57
    %v402 = vadd.f32 %v396, %v400
    %v403 = vadd.f32 %v397, %v401
    %v404 = vmax.f32 %v402, 0.0
    %v405 = vmax.f32 %v403, 0.0
    %s406 = sld [smem:[#allocation2 + $0x4e]]
    %s407 = sld [smem:[#allocation2 + $0x3c]]
    %v408 = vstv %s407
    %v409 = vmul.f32 %v408, %v114
    %v410 = vmul.f32 %v408, %v115
    %v411 = vstv %s406
    %v412 = vadd.f32 %v411, %v409
    %v413 = vadd.f32 %v411, %v410
    %s414 = sld [smem:[#allocation2 + $0x3d]]
    %v415 = vstv %s414
    %v416 = vmul.f32 %v415, %v172
    %v417 = vmul.f32 %v415, %v173
    %v418 = vadd.f32 %v412, %v416
    %v419 = vadd.f32 %v413, %v417
    %s420 = sld [smem:[#allocation2 + $0x3e]]
    %v421 = vstv %s420
    %v422 = vmul.f32 %v421, %v230
    %v423 = vmul.f32 %v421, %v231
    %v424 = vadd.f32 %v418, %v422
    %v425 = vadd.f32 %v419, %v423
    %s426 = sld [smem:[#allocation2 + $0x3f]]
    %v427 = vstv %s426
    %v428 = vmul.f32 %v427, %v288
    %v429 = vmul.f32 %v427, %v289
    %v430 = vadd.f32 %v424, %v428
    %v431 = vadd.f32 %v425, %v429
    %s432 = sld [smem:[#allocation2 + $0x40]]
    %v433 = vstv %s432
    %v434 = vmul.f32 %v433, %v346
    %v435 = vmul.f32 %v433, %v347
    %v436 = vadd.f32 %v430, %v434
    %v437 = vadd.f32 %v431, %v435
    %s438 = sld [smem:[#allocation2 + $0x41]]
    %v439 = vstv %s438
    %v440 = vmul.f32 %v439, %v404
    %v441 = vmul.f32 %v439, %v405
    %v442 = vadd.f32 %v436, %v440
    %v443 = vadd.f32 %v437, %v441
    %v444 = vmax.f32 %v442, 0.0
    %v445 = vmax.f32 %v443, 0.0
    %s446 = sld [smem:[#allocation2 + $0x4f]]
    %s447 = sld [smem:[#allocation2 + $0x42]]
    %v448 = vstv %s447
    %v449 = vmul.f32 %v448, %v114
    %v450 = vmul.f32 %v448, %v115
    %v451 = vstv %s446
    %v452 = vadd.f32 %v451, %v449
    %v453 = vadd.f32 %v451, %v450
    %s454 = sld [smem:[#allocation2 + $0x43]]
    %v455 = vstv %s454
    %v456 = vmul.f32 %v455, %v172
    %v457 = vmul.f32 %v455, %v173
    %v458 = vadd.f32 %v452, %v456
    %v459 = vadd.f32 %v453, %v457
    %s460 = sld [smem:[#allocation2 + $0x44]]
    %v461 = vstv %s460
    %v462 = vmul.f32 %v461, %v230
    %v463 = vmul.f32 %v461, %v231
    %v464 = vadd.f32 %v458, %v462
    %v465 = vadd.f32 %v459, %v463
    %s466 = sld [smem:[#allocation2 + $0x45]]
    %v467 = vstv %s466
    %v468 = vmul.f32 %v467, %v288
    %v469 = vmul.f32 %v467, %v289
    %v470 = vadd.f32 %v464, %v468
    %v471 = vadd.f32 %v465, %v469
    %s472 = sld [smem:[#allocation2 + $0x46]]
    %v473 = vstv %s472
    %v474 = vmul.f32 %v473, %v346
    %v475 = vmul.f32 %v473, %v347
    %v476 = vadd.f32 %v470, %v474
    %v477 = vadd.f32 %v471, %v475
    %s478 = sld [smem:[#allocation2 + $0x47]]
    %v479 = vstv %s478
    %v480 = vmul.f32 %v479, %v404
    %v481 = vmul.f32 %v479, %v405
    %v482 = vadd.f32 %v476, %v480
    %v483 = vadd.f32 %v477, %v481
    %v484 = vmax.f32 %v482, 0.0
    %v485 = vmax.f32 %v483, 0.0
    %s486 = sld [smem:[#allocation2 + $0x50]]
    %s487 = sld [smem:[#allocation2 + $0x48]]
    %v488 = vstv %s487
    %v489 = vmul.f32 %v488, %v114
    %v490 = vmul.f32 %v488, %v115
    %v491 = vstv %s486
    %v492 = vadd.f32 %v491, %v489
    %v493 = vadd.f32 %v491, %v490
    %s494 = sld [smem:[#allocation2 + $0x49]]
    %v495 = vstv %s494
    %v496 = vmul.f32 %v495, %v172
    %v497 = vmul.f32 %v495, %v173
    %v498 = vadd.f32 %v492, %v496
    %v499 = vadd.f32 %v493, %v497
    %s500 = sld [smem:[#allocation2 + $0x4a]]
    %v501 = vstv %s500
    %v502 = vmul.f32 %v501, %v230
    %v503 = vmul.f32 %v501, %v231
    %v504 = vadd.f32 %v498, %v502
    %v505 = vadd.f32 %v499, %v503
    %s506 = sld [smem:[#allocation2 + $0x4b]]
    %v507 = vstv %s506
    %v508 = vmul.f32 %v507, %v288
    %v509 = vmul.f32 %v507, %v289
    %v510 = vadd.f32 %v504, %v508
    %v511 = vadd.f32 %v505, %v509
    %s512 = sld [smem:[#allocation2 + $0x4c]]
    %v513 = vstv %s512
    %v514 = vmul.f32 %v513, %v346
    %v515 = vmul.f32 %v513, %v347
    %v516 = vadd.f32 %v510, %v514
    %v517 = vadd.f32 %v511, %v515
    %s518 = sld [smem:[#allocation2 + $0x4d]]
    %v519 = vstv %s518
    %v520 = vmul.f32 %v519, %v404
    %v521 = vmul.f32 %v519, %v405
    %v522 = vadd.f32 %v516, %v520
    %v523 = vadd.f32 %v517, %v521
    %v524 = vmax.f32 %v522, 0.0
    %v525 = vmax.f32 %v523, 0.0
    %s526 = sld [smem:[#allocation2 + $0x54]]
    %s527 = sld [smem:[#allocation2 + $0x51]]
    %v528 = vstv %s527
    %v529 = vmul.f32 %v528, %v444
    %v530 = vmul.f32 %v528, %v445
    %v531 = vstv %s526
    %v532 = vadd.f32 %v531, %v529
    %v533 = vadd.f32 %v531, %v530
    %s534 = sld [smem:[#allocation2 + $0x52]]
    %v535 = vstv %s534
    %v536 = vmul.f32 %v535, %v484
    %v537 = vmul.f32 %v535, %v485
    %v538 = vadd.f32 %v532, %v536
    %v539 = vadd.f32 %v533, %v537
    %s540 = sld [smem:[#allocation2 + $0x53]]
    %v541 = vstv %s540
    %v542 = vmul.f32 %v541, %v524
    %v543 = vmul.f32 %v541, %v525
    %v544 = vadd.f32 %v538, %v542
    %v545 = vadd.f32 %v539, %v543
    %v546 = vsub.f32 0.0, %v544
    %v547 = vsub.f32 0.0, %v545
    %v548 = vmul.f32 %v546, 1.442695
    %v549 = vpow.pop %v548
    %v550 = vmul.f32 %v547, 1.442695
    %v551 = vpow.pop %v550
    %v552 = vadd.f32 %v549, 1.0
    %v553 = vadd.f32 %v551, 1.0
    %v554 = vrcp.pop %v552
    %v555 = vrcp.pop %v553
    %556 = vst [vmem:[%s2] sm:$0xff] %v554
    %557 = vst [vmem:[%s2 + $0x8] sm:$0xff] %v555
    // Predicated region
    $region14: #{mlp_forward.1} parent=1 // pred_check
      _
    $region15: #{mlp_forward.1} parent=1 // pred_check_branch
      %559 = sbr.rel (0) target = $region17
    $region16: #{mlp_forward.1} parent=1 // pred_region
      _
    $region17: #{mlp_forward.1} parent=1 // pred_fallthru
      _
    // Predicated region
    $region18: #{mlp_forward.1} parent=1 // pred_check
      _
    $region19: #{mlp_forward.1} parent=1 // pred_check_branch
      %561 = sbr.rel (0) target = $region21
    $region20: #{mlp_forward.1} parent=1 // pred_region
      _
    $region21: #{mlp_forward.1} parent=1 // pred_fallthru
      _
    %562 = vsyncpa [#allocation3], 1

</llo_original>
